<compile_context>
chip_gen: v7x
topology: tpu7x:2x2x1
jax: 0.10.0
libtpu: 0.0.40
codegen_flags: <defaults>
</compile_context>

<pallas_src>
import jax
import jax.numpy as jnp
from jax.experimental import pallas as pl
from jax.experimental.pallas import tpu as pltpu


def _ceil_div(a, b):
    return -(-a // b)


def _round_up(n, m):
    return _ceil_div(n, m) * m


def perceptron_kernel(params_ref, x_ref, o_ref):
    # params_ref: SMEM (3,)    f32 = [w0, w1, b]
    # x_ref:      VMEM (16,TC) f32  (rows 0:8 = feature 0, rows 8:16 = feature 1)
    # o_ref:      VMEM (8, TC) f32  (fully dense output slab)
    w0 = params_ref[0]
    w1 = params_ref[1]
    b = params_ref[2]

    x0 = x_ref[0:8, :]      # (8, TC)  tile-aligned static slice
    x1 = x_ref[8:16, :]     # (8, TC)

    # Linear as two elementwise FMAs on the VPU against SMEM scalars.
    z = x0 * w0 + x1 * w1 + b

    # Exact sigmoid: exp goes to the EUP; f32 divide is fine (kernel is DMA-bound).
    o_ref[...] = 1.0 / (1.0 + jnp.exp(-z))


# Per-tile lane budget: one (16, TC) input block + one (8, TC) output block,
# double buffered = 192*TC bytes.  TC = 64K lanes (512K batch elements) ~= 12 MiB,
# inside every generation's default scoped VMEM.
_TC_MAX = 64 * 1024            # lanes per tile  (== 512K batch elements)
_MIN_SPLIT_LANES = 16 * 1024   # only split across >=2 tiles (v7x megacore) if
                               # each tile still carries >=128K batch elements


def _perceptron_forward(x, weight, bias):
    """x: (B, 2) f32, weight: (1, 2) f32, bias: (1, 1) f32 -> (B, 1) f32."""
    B, F = x.shape
    assert F == 2 and weight.shape == (1, 2) and bias.shape == (1, 1)

    # Pack weight + bias into a single SMEM scalar vector.
    params = jnp.concatenate(
        [weight.reshape(-1), bias.reshape(-1)]
    ).astype(jnp.float32)                                          # (3,)

    # ---- tiling plan (all static, derived from shapes) ----------------------
    lanes0 = _round_up(max(B, 1), 8 * 128) // 8        # lane width, %128 == 0
    n_tiles = _ceil_div(lanes0, _TC_MAX)
    if n_tiles == 1 and lanes0 >= 2 * _MIN_SPLIT_LANES:
        n_tiles = 2                                    # let both v7x TCs stream
    tc = _round_up(_ceil_div(lanes0, n_tiles), 128)    # nearly-full last tile
    lanes = n_tiles * tc
    b_pad = 8 * lanes

    # ---- layout: batch -> dense (sublane, lane) slabs ------------------------
    # Feature-major view reshaped to (16, lanes): rows 0..7 hold x[:,0] chunks,
    # rows 8..15 hold x[:,1] chunks.  The transpose/pad is a separate XLA pass
    # but this wrapper is jit-ed so it fuses with the producer of `x` where
    # possible (feature-major producers can feed the kernel directly).
    xt = jnp.pad(x.T.astype(jnp.float32), ((0, 0), (0, b_pad - B)))   # (2, b_pad)
    x_slab = xt.reshape(16, lanes)

    out_slab = pl.pallas_call(
        perceptron_kernel,
        out_shape=jax.ShapeDtypeStruct((8, lanes), jnp.float32),
        grid_spec=pl.GridSpec(
            grid=(n_tiles,),
            in_specs=[
                # whole (3,) params array in SMEM, untiled
                pl.BlockSpec(memory_space=pltpu.MemorySpace.SMEM),
                # (16, tc): sublane dim %8 == 0 (and full extent), lane dim %128 == 0
                pl.BlockSpec((16, tc), lambda i: (0, i)),
            ],
            out_specs=pl.BlockSpec((8, tc), lambda i: (0, i)),
        ),
        compiler_params=pltpu.CompilerParams(
            dimension_semantics=("parallel",),          # shard batch tiles on v7x
            vmem_limit_bytes=32 * 1024 * 1024,          # safe on v5e/v6e/v7x
        ),
        cost_estimate=pl.CostEstimate(
            flops=4 * b_pad,            # 2 mul + 2 add per element
            transcendentals=b_pad,      # exp
            bytes_accessed=12 * b_pad,  # 8 B in + 4 B out per element
        ),
    )(params, x_slab)

    # Row-major flatten of the (8, lanes) slab restores batch order exactly.
    return out_slab.reshape(b_pad)[:B].reshape(B, 1)


perceptron_forward = jax.jit(_perceptron_forward)


if __name__ == "__main__":
    key = jax.random.PRNGKey(0)
    kx, kw, kb = jax.random.split(key, 3)

    B = 8
    x = jax.random.normal(kx, (B, 2), dtype=jnp.float32)

    # Deterministic init mimicking PyTorch nn.Linear default: U(-1/sqrt(fan_in), 1/sqrt(fan_in))
    bound = 1.0 / jnp.sqrt(2.0)
    weight = jax.random.uniform(kw, (1, 2), minval=-bound, maxval=bound, dtype=jnp.float32)
    bias = jax.random.uniform(kb, (1, 1), minval=-bound, maxval=bound, dtype=jnp.float32)

    out = perceptron_forward(x, weight, bias)
    jax.block_until_ready(out)

    # Reference check in plain JAX.
    ref = jax.nn.sigmoid(x @ weight.T + bias)
    assert out.shape == (B, 1)
    assert jnp.allclose(out, ref, atol=1e-6), "mismatch vs reference"

    print("KERNEL_OK")
</pallas_src>

<mosaic_0001>
module attributes {stable_mosaic.version = 11 : i64} {
  func.func @perceptron_kernel(%arg0: i32, %arg1: memref<3xf32, #tpu.memory_space<smem>>, %arg2: memref<16x128xf32, #tpu.memory_space<vmem>>, %arg3: memref<8x128xf32, #tpu.memory_space<vmem>>) attributes {dimension_semantics = [#tpu.dimension_semantics<parallel>], iteration_bounds = array<i64: 1>, scalar_prefetch = 0 : i64, scratch_operands = 0 : i64, tpu.core_type = #tpu.core_type<tc>, window_params = [{transform_indices = @transform_0, window_bounds = array<i64: 3>}, {transform_indices = @transform_1, window_bounds = array<i64: 16, 128>}, {transform_indices = @transform_2, window_bounds = array<i64: 8, 128>}]} {
    %c0 = arith.constant 0 : index
    %0 = memref.load %arg1[%c0] : memref<3xf32, #tpu.memory_space<smem>>
    %c1 = arith.constant 1 : index
    %1 = memref.load %arg1[%c1] : memref<3xf32, #tpu.memory_space<smem>>
    %c2 = arith.constant 2 : index
    %2 = memref.load %arg1[%c2] : memref<3xf32, #tpu.memory_space<smem>>
    %c0_0 = arith.constant 0 : index
    %c0_1 = arith.constant 0 : index
    %3 = vector.load %arg2[%c0_0, %c0_1] : memref<16x128xf32, #tpu.memory_space<vmem>>, vector<8x128xf32>
    %c8 = arith.constant 8 : index
    %c0_2 = arith.constant 0 : index
    %4 = vector.load %arg2[%c8, %c0_2] : memref<16x128xf32, #tpu.memory_space<vmem>>, vector<8x128xf32>
    %5 = vector.broadcast %0 : f32 to vector<8x128xf32>
    %6 = arith.mulf %3, %5 : vector<8x128xf32>
    %7 = vector.broadcast %1 : f32 to vector<8x128xf32>
    %8 = arith.mulf %4, %7 : vector<8x128xf32>
    %9 = arith.addf %6, %8 : vector<8x128xf32>
    %10 = vector.broadcast %2 : f32 to vector<8x128xf32>
    %11 = arith.addf %9, %10 : vector<8x128xf32>
    %cst = arith.constant 0.000000e+00 : f32
    %12 = vector.broadcast %cst : f32 to vector<8x128xf32>
    %13 = arith.subf %12, %11 : vector<8x128xf32>
    %14 = math.exp %13 : vector<8x128xf32>
    %cst_3 = arith.constant 1.000000e+00 : f32
    %15 = vector.broadcast %cst_3 : f32 to vector<8x128xf32>
    %16 = arith.addf %15, %14 : vector<8x128xf32>
    %cst_4 = arith.constant 1.000000e+00 : f32
    %17 = vector.broadcast %cst_4 : f32 to vector<8x128xf32>
    %18 = arith.divf %17, %16 : vector<8x128xf32>
    %c0_5 = arith.constant 0 : index
    %c0_6 = arith.constant 0 : index
    %19 = vector.load %arg3[%c0_5, %c0_6] : memref<8x128xf32, #tpu.memory_space<vmem>>, vector<8x128xf32>
    tpu.vector_store %arg3[%c0_5, %c0_6], %18 {strides = array<i32>} : memref<8x128xf32, #tpu.memory_space<vmem>>, vector<8x128xf32>,
    return
  }
  func.func @transform_0(%arg0: i32) -> i32 {
    %c0_i32 = arith.constant 0 : i32
    %c0_i32_0 = arith.constant 0 : i32
    return %c0_i32 : i32
  }
  func.func @transform_1(%arg0: i32) -> (i32, i32) {
    %c0_i32 = arith.constant 0 : i32
    %c0_i32_0 = arith.constant 0 : i32
    return %c0_i32, %arg0 : i32, i32
  }
  func.func @transform_2(%arg0: i32) -> (i32, i32) {
    %c0_i32 = arith.constant 0 : i32
    %c0_i32_0 = arith.constant 0 : i32
    return %c0_i32, %arg0 : i32, i32
  }
}

</mosaic_0001>

<llo_original>
// kernel: _perceptron_forward.1
$region0: #{_perceptron_forward.1}
  #allocation0 [shape = 'u32[]', space=smem, size = 0x4, offset = 0x4, fixed_abs, tag = 'smem constant byte address 0x4 - core index']
  #allocation1 [shape = 'u32[144,128]{1,0:T(1,128)}', space=vmem, size = 0x12000, scoped, tag = 'internal scratch']
  %s0 = inlined_call_operand.vmem [shape: f32[3], index: 0, kind: input, shape index: {}]
  %s1 = inlined_call_operand.vmem [shape: f32[16,128], index: 1, kind: input, shape index: {}]
  %s2 = inlined_call_operand.vmem [shape: f32[8,128], index: 2, kind: output, shape index: {}]
  %s3 = sld [smem:[#allocation0]]
  $region22: #{_perceptron_forward.1} parent=0
    _
  %s5 = ssub.s32 1, %s3
  %s6 = scalar_select 0, %s5, %s3
  $region1: #{_perceptron_forward.1} parent=0
    #allocation2 [shape = 'u8[512]{0}', space=smem, size = 0x200, scoped, tag = 'input window, operand 0, single buffered']
    #allocation3 [shape = 's32[1]{0}', space=sflag, size = 0x4, scoped, tag = 'scoped memory for _perceptron_forward.1']
    %7 = vsyncpa [#allocation3], 0
    // Predicated region
    $region2: #{_perceptron_forward.1} parent=1 // pred_check
      _
    $region3: #{_perceptron_forward.1} parent=1 // pred_check_branch
      %9 = sbr.rel (0) target = $region5
    $region4: #{_perceptron_forward.1} parent=1 // pred_region
      %s11 = ssub.s32 16, 16
      %12 = vsyncadd [#allocation3], %s11
      %s14 = sshll.u32 %s0, 4
      %s15 = int_to_ptr.vmem [resolvable:$true] %s14
      %17 = dma.vmem_to_smem %s15, 16, [#allocation2], [#allocation3]
    $region5: #{_perceptron_forward.1} parent=1 // pred_fallthru
      _
    // Predicated region
    $region6: #{_perceptron_forward.1} parent=1 // pred_check
      _
    $region7: #{_perceptron_forward.1} parent=1 // pred_check_branch
      %19 = sbr.rel (0) target = $region9
    $region8: #{_perceptron_forward.1} parent=1 // pred_region
      _
    $region9: #{_perceptron_forward.1} parent=1 // pred_fallthru
      _
    // Predicated region
    $region10: #{_perceptron_forward.1} parent=1 // pred_check
      _
    $region11: #{_perceptron_forward.1} parent=1 // pred_check_branch
      %21 = sbr.rel (0) target = $region13
    $region12: #{_perceptron_forward.1} parent=1 // pred_region
      %22 = dma.done [#allocation3], 16
    $region13: #{_perceptron_forward.1} parent=1 // pred_fallthru
      _
    %23 = sfence
    %s24 = sld [smem:[#allocation2]]
    %s25 = sld [smem:[#allocation2 + $0x1]]
    %s26 = sld [smem:[#allocation2 + $0x2]]
    %v27 = vld [vmem:[%s1] sm:$0xff]
    %v28 = vld [vmem:[%s1 + $0x8] sm:$0xff]
    %v29 = vstv %s24
    %v30 = vmul.f32 %v27, %v29
    %v31 = vstv %s25
    %v32 = vmul.f32 %v28, %v31
    %v33 = vadd.f32 %v30, %v32
    %v34 = vstv %s26
    %v35 = vadd.f32 %v33, %v34
    %v36 = vsub.f32 0.0, %v35
    %v37 = vmul.f32 %v36, 1.442695
    %v38 = vpow.pop %v37
    %v39 = vadd.f32 %v38, 1.0
    %v40 = vrcp.pop %v39
    %v41 = vmul.f32 1.0, %v40
    %42 = vst [vmem:[%s2] sm:$0xff] %v41
    // Predicated region
    $region14: #{_perceptron_forward.1} parent=1 // pred_check
      _
    $region15: #{_perceptron_forward.1} parent=1 // pred_check_branch
      %44 = sbr.rel (0) target = $region17
    $region16: #{_perceptron_forward.1} parent=1 // pred_region
      _
    $region17: #{_perceptron_forward.1} parent=1 // pred_fallthru
      _
    // Predicated region
    $region18: #{_perceptron_forward.1} parent=1 // pred_check
      _
    $region19: #{_perceptron_forward.1} parent=1 // pred_check_branch
      %46 = sbr.rel (0) target = $region21
    $region20: #{_perceptron_forward.1} parent=1 // pred_region
      _
    $region21: #{_perceptron_forward.1} parent=1 // pred_fallthru
      _
    %47 = vsyncpa [#allocation3], 1

</llo_original>
